<compile_context>
chip_gen: v5e
topology: v5e:2x2
jax: 0.10.0
libtpu: 0.0.40
codegen_flags: <defaults>
</compile_context>

<pallas_src>
import numpy as np

import jax
import jax.numpy as jnp
from jax import lax
from jax.experimental import pallas as pl
from jax.experimental.pallas import tpu as pltpu

# ---------------------------------------------------------------- config ----
C_IN = 4                 # input volume channels
C_FEAT = 4               # feature-extractor output channels (1x1x1 conv)
D = H = W = 8
VOX = D * H * W          # 512

# Scale 0: (2,2,2) patches, 64 total -> uniform-sampled to 8, MLP embedding.
P0 = (2, 2, 2)
P0_VOX = 8
N_P0_TOTAL = 64
MAX_P0 = 8
A0_COLS = P0_VOX * C_IN      # 32  sampled-patch row width (v-major, ci-minor)
FLAT0 = C_FEAT * P0_VOX      # 32  PyTorch flatten(C, pd, ph, pw) width
HID = 32
MLP_OUT = 16

# Scale 1: (4,4,4) patches, 8 patches, avg-pool embedding (embed dim = C_FEAT).
P1 = (4, 4, 4)
P1_VOX = 64
N_P1 = 8

N_LAYERS = 2
ROWS = N_LAYERS * MAX_P0     # 16 output rows (layer-major, patch-minor)
EMB = MLP_OUT + C_FEAT       # 20 real embedding width (concat fusion)
OUT_PAD = 128                # lane-dense padded output width

# Packed weight-slab layout (rows x 128 lanes); all matmul operands start at
# lane 0 and 8-aligned sublanes so no relayout is needed inside the kernel.
_WBIG_R0 = 0                 # rows  0:32  cols 0:64   Kron extractor (both layers)
_W1_R0 = 32                  # rows 32:64  cols 0:32   MLP layer 1
_W2_R0 = 64                  # rows 64:96  cols 0:16   MLP layer 2
_WCAT_R0 = 96                # rows 96:100 cols 0:8    pool-scale conv (both layers)
_BBIG_R = 104                # biases, one row each
_B1_R = 105
_B2_R = 106
_BCAT_R = 107
SLAB_ROWS = 112


# ---------------------------------------------------------------- kernel ----
def _fused_kernel(a_ref, vol_ref, slab_ref, pm_ref, out_ref):
    f32 = jnp.float32

    def mm(x, y):
        return jnp.dot(x, y, preferred_element_type=f32)

    # ---- static views into the packed constant slab (free ref slices) -----
    wbig = slab_ref[_WBIG_R0:_WBIG_R0 + A0_COLS, 0:N_LAYERS * FLAT0]   # (32, 64)
    w1 = slab_ref[_W1_R0:_W1_R0 + FLAT0, 0:HID]                        # (32, 32)
    w2 = slab_ref[_W2_R0:_W2_R0 + HID, 0:MLP_OUT]                      # (32, 16)
    wcat = slab_ref[_WCAT_R0:_WCAT_R0 + C_IN, 0:N_LAYERS * C_FEAT]     # (4, 8)
    bbig = slab_ref[_BBIG_R:_BBIG_R + 1, 0:N_LAYERS * FLAT0]           # (1, 64)
    b1 = slab_ref[_B1_R:_B1_R + 1, 0:HID]                              # (1, 32)
    b2 = slab_ref[_B2_R:_B2_R + 1, 0:MLP_OUT]                          # (1, 16)
    bcat = slab_ref[_BCAT_R:_BCAT_R + 1, 0:N_LAYERS * C_FEAT]          # (1, 8)

    # ---- scale 0: "1x1x1 conv + ReLU + flatten(C,pd,ph,pw)" for BOTH layers
    #      in ONE matmul against the Kronecker-expanded extractor weights ----
    flat_wide = jnp.maximum(mm(a_ref[...], wbig) + bbig, 0.0)          # (8, 64)
    flat_both = jnp.concatenate(
        [flat_wide[:, 0:FLAT0], flat_wide[:, FLAT0:N_LAYERS * FLAT0]],
        axis=0)                                                        # (16, 32)

    # ---- shared MLP over both layers' sampled patches ----------------------
    h = jnp.maximum(mm(flat_both, w1) + b1, 0.0)                       # (16, 32)
    # TODO(synk): Dropout(0.1) is identity at inference; training-mode dropout
    # (pltpu.prng_*) is not implemented.
    e_mlp = mm(h, w2) + b2                                             # (16, 16)

    # ---- scale 1: 1x1x1 conv + ReLU over all voxels (both layers on lanes),
    #      AvgPool3d(4,4,4) as a patch-major matmul (idx1 folded into pm) ----
    feat = jnp.maximum(mm(vol_ref[...], wcat) + bcat, 0.0)             # (512, 8)
    e_pool = mm(pm_ref[...], feat)                                     # (8, 8) [patch, (layer,c)]

    # ---- concat fusion -> assemble in vregs, ONE unmasked (16,128) store ---
    ztail = jnp.zeros((MAX_P0, OUT_PAD - EMB), f32)
    blk0 = jnp.concatenate(
        [e_mlp[0:MAX_P0, :], e_pool[:, 0:C_FEAT], ztail], axis=1)       # (8, 128)
    blk1 = jnp.concatenate(
        [e_mlp[MAX_P0:ROWS, :], e_pool[:, C_FEAT:N_LAYERS * C_FEAT], ztail],
        axis=1)                                                         # (8, 128)
    out_ref[...] = jnp.concatenate([blk0, blk1], axis=0)                # (16, 128)


# ------------------------------------------------------- one-time setup ----
def build_fused_params(layer_params, layer_names, mlp_params):
    """Hoisted preprocessing (ONE time): casts, Kronecker expansion of the
    extractor weights, slab packing, pooling matrix over the original voxel
    ordering, and the scale-0 gather indices."""
    eye8 = np.eye(P0_VOX, dtype=np.float32)
    wbig_l, bbig_l, wcat_l, bcat_l = [], [], [], []
    for name in layer_names:
        w, b = layer_params[name]
        w = np.asarray(w, np.float32)                    # (C_IN, C_FEAT)
        b = np.asarray(b, np.float32)                    # (C_FEAT,)
        # Wbig[v*C_IN + ci, c*P0_VOX + v'] = w[ci, c] * delta(v, v')
        wbig_l.append(np.einsum('ic,vu->vicu', w, eye8).reshape(A0_COLS, FLAT0))
        bbig_l.append(np.repeat(b, P0_VOX))              # (32,)
        wcat_l.append(w)
        bcat_l.append(b)

    slab = np.zeros((SLAB_ROWS, OUT_PAD), np.float32)
    slab[_WBIG_R0:_WBIG_R0 + A0_COLS, 0:N_LAYERS * FLAT0] = np.concatenate(wbig_l, axis=1)
    slab[_W1_R0:_W1_R0 + FLAT0, 0:HID] = np.asarray(mlp_params["w1"], np.float32)
    slab[_W2_R0:_W2_R0 + HID, 0:MLP_OUT] = np.asarray(mlp_params["w2"], np.float32)
    slab[_WCAT_R0:_WCAT_R0 + C_IN, 0:N_LAYERS * C_FEAT] = np.concatenate(wcat_l, axis=1)
    slab[_BBIG_R, 0:N_LAYERS * FLAT0] = np.concatenate(bbig_l)
    slab[_B1_R, 0:HID] = np.asarray(mlp_params["b1"], np.float32)
    slab[_B2_R, 0:MLP_OUT] = np.asarray(mlp_params["b2"], np.float32)
    slab[_BCAT_R, 0:N_LAYERS * C_FEAT] = np.concatenate(bcat_l)

    # Pooling matrix over the ORIGINAL voxel ordering (patch permutation of the
    # old `idx1` gather is folded in): pm[patch, voxel] = 1/64 if voxel in patch.
    pm = np.zeros((N_P1, VOX), np.float32)
    for v in range(VOX):
        d, h, w_ = v // (H * W), (v // W) % H, v % W
        p = (d // P1[0]) * 4 + (h // P1[1]) * 2 + (w_ // P1[2])
        pm[p, v] = 1.0 / P1_VOX

    # Scale-0 uniform sampling == torch.linspace(0, N-1, max).long(); flat-voxel
    # gather indices for the 8 sampled (2,2,2) patches.
    sampled = np.linspace(0.0, N_P0_TOTAL - 1, MAX_P0).astype(np.int64)
    idx0 = np.empty((MAX_P0, P0_VOX), np.int32)
    for i, pidx in enumerate(sampled):                   # patch order: d, h, w major
        pd, ph, pw = pidx // 16, (pidx // 4) % 4, pidx % 4
        for v in range(P0_VOX):                          # v = dd*4 + hh*2 + ww
            dd, hh, ww = v // 4, (v // 2) % 2, v % 2
            idx0[i, v] = ((pd * 2 + dd) * (H * W) + (ph * 2 + hh) * W
                          + (pw * 2 + ww))

    return dict(slab=jnp.asarray(slab), pm=jnp.asarray(pm),
                idx0=jnp.asarray(idx0))


# ------------------------------------------------------------- forward ----
@jax.jit
def multi_scale_feature_embedding(volume, fused):
    """MultiScaleFeatureEmbedding.forward (2 layers of 1x1x1-conv+ReLU feature
    extraction; scales = [MLP on sampled (2,2,2) patches, avg-pool on (4,4,4)
    patches]; fusion = concat)."""
    f32 = jnp.float32
    if volume.ndim == 5:
        if volume.shape[0] != 1:
            raise ValueError("batched volumes not supported; batch must be 1")
        volume = volume[0]
    vol = volume.reshape(C_IN, VOX).T.astype(f32)            # (512, 4) voxel-major
    # Tiny gather of the 8 sampled (2,2,2) patches on the RAW volume (the 1x1x1
    # conv commutes with the spatial gather).
    a = vol[fused["idx0"]].reshape(MAX_P0, A0_COLS)           # (8, 32)

    vmem = pl.BlockSpec(memory_space=pltpu.MemorySpace.VMEM)
    cost = pl.CostEstimate(flops=180224, transcendentals=0, bytes_accessed=91136)
    out_padded = pl.pallas_call(
        _fused_kernel,
        out_shape=jax.ShapeDtypeStruct((ROWS, OUT_PAD), f32),
        in_specs=[vmem] * 4,                  # a, vol, weight slab, pool matrix
        out_specs=vmem,                       # one dense (16,128) HBM writeback
        cost_estimate=cost,
    )(a, vol, fused["slab"], fused["pm"])
    return out_padded[:, :EMB]

# TODO(synk): 'random' sampling (torch.randperm), 'attention' fusion
# (nn.MultiheadAttention) and 'max'/'adaptive' pooling are not exercised by
# this configuration and are not implemented in the fused kernel.


# ------------------------------------------------- pure-JAX reference ------
def _ref_extract_patches(fmap, patch_size):
    C, Dd, Hh, Ww = fmap.shape
    pd, ph, pw = patch_size
    x = fmap.reshape(C, Dd // pd, pd, Hh // ph, ph, Ww // pw, pw)
    x = jnp.transpose(x, (1, 3, 5, 0, 2, 4, 6))
    return x.reshape(-1, C, pd, ph, pw)


def _reference_forward(volume, layer_params, layer_names, mlp_params):
    hp = lax.Precision.HIGHEST
    x = volume[0].astype(jnp.float32).reshape(C_IN, -1).T       # (voxels, C_in)
    outs = []
    for name in layer_names:
        w, b = layer_params[name]
        feat = jnp.maximum(jnp.dot(x, w.astype(jnp.float32), precision=hp)
                           + b.astype(jnp.float32), 0.0)
        fmap = feat.T.reshape(C_FEAT, D, H, W)
        # scale 0: (2,2,2) patches, uniform sample, MLP
        p0 = _ref_extract_patches(fmap, P0)
        idx = jnp.asarray(np.linspace(0.0, p0.shape[0] - 1, MAX_P0)
                          .astype(np.int64))
        flat = p0[idx].reshape(MAX_P0, -1)
        h = jnp.maximum(jnp.dot(flat, mlp_params["w1"], precision=hp)
                        + mlp_params["b1"], 0.0)
        e0 = jnp.dot(h, mlp_params["w2"], precision=hp) + mlp_params["b2"]
        # scale 1: (4,4,4) patches, avg-pool
        p1 = _ref_extract_patches(fmap, P1)
        e1 = p1.reshape(N_P1, C_FEAT, -1).mean(axis=-1)
        outs.append(jnp.concatenate([e0, e1], axis=1))
    return jnp.concatenate(outs, axis=0)


# ------------------------------------------------------------------ main ---
if __name__ == "__main__":
    key = jax.random.PRNGKey(0)
    ks = jax.random.split(key, 8)

    volume = jax.random.normal(ks[0], (1, C_IN, D, H, W), jnp.float32)

    layer_names = ["layer1", "layer2"]
    layer_params = {
        "layer1": (0.2 * jax.random.normal(ks[1], (C_IN, C_FEAT), jnp.float32),
                   0.01 * jnp.arange(C_FEAT, dtype=jnp.float32)),
        "layer2": (0.2 * jax.random.normal(ks[2], (C_IN, C_FEAT), jnp.float32),
                   0.02 * jnp.arange(C_FEAT, dtype=jnp.float32)),
    }
    mlp_params = {
        "w1": 0.1 * jax.random.normal(ks[3], (FLAT0, HID), jnp.float32),
        "b1": 0.01 * jnp.arange(HID, dtype=jnp.float32),
        "w2": 0.1 * jax.random.normal(ks[4], (HID, MLP_OUT), jnp.float32),
        "b2": 0.01 * jnp.arange(MLP_OUT, dtype=jnp.float32),
    }

    fused = build_fused_params(layer_params, layer_names, mlp_params)
    out = jax.block_until_ready(multi_scale_feature_embedding(volume, fused))

    # Expected: 2 layers * 8 patches = 16 rows, embed dim = 16 (mlp) + 4 (pool).
    assert out.shape == (ROWS, EMB), out.shape
    assert bool(jnp.all(jnp.isfinite(out)))

    ref = _reference_forward(volume, layer_params, layer_names, mlp_params)
    max_err = float(jnp.max(jnp.abs(out - ref)))
    assert bool(jnp.allclose(out, ref, rtol=1e-2, atol=1e-2)), max_err

    print("KERNEL_OK")
</pallas_src>

<mosaic_0001>
module attributes {stable_mosaic.version = 11 : i64} {
  func.func @_fused_kernel(%arg0: memref<8x32xf32, #tpu.memory_space<vmem>>, %arg1: memref<512x4xf32, #tpu.memory_space<vmem>>, %arg2: memref<112x128xf32, #tpu.memory_space<vmem>>, %arg3: memref<8x512xf32, #tpu.memory_space<vmem>>, %arg4: memref<16x128xf32, #tpu.memory_space<vmem>>) attributes {dimension_semantics = [], scalar_prefetch = 0 : i64, scratch_operands = 0 : i64, tpu.core_type = #tpu.core_type<tc>} {
    %c0 = arith.constant 0 : index
    %c0_0 = arith.constant 0 : index
    %0 = vector.load %arg2[%c0, %c0_0] : memref<112x128xf32, #tpu.memory_space<vmem>>, vector<32x64xf32>
    %c32 = arith.constant 32 : index
    %c0_1 = arith.constant 0 : index
    %1 = vector.load %arg2[%c32, %c0_1] : memref<112x128xf32, #tpu.memory_space<vmem>>, vector<32x32xf32>
    %c64 = arith.constant 64 : index
    %c0_2 = arith.constant 0 : index
    %2 = vector.load %arg2[%c64, %c0_2] : memref<112x128xf32, #tpu.memory_space<vmem>>, vector<32x16xf32>
    %c96 = arith.constant 96 : index
    %c0_3 = arith.constant 0 : index
    %3 = vector.load %arg2[%c96, %c0_3] : memref<112x128xf32, #tpu.memory_space<vmem>>, vector<4x8xf32>
    %c104 = arith.constant 104 : index
    %c0_4 = arith.constant 0 : index
    %4 = vector.load %arg2[%c104, %c0_4] : memref<112x128xf32, #tpu.memory_space<vmem>>, vector<1x64xf32>
    %c105 = arith.constant 105 : index
    %c0_5 = arith.constant 0 : index
    %5 = vector.load %arg2[%c105, %c0_5] : memref<112x128xf32, #tpu.memory_space<vmem>>, vector<1x32xf32>
    %c106 = arith.constant 106 : index
    %c0_6 = arith.constant 0 : index
    %6 = vector.load %arg2[%c106, %c0_6] : memref<112x128xf32, #tpu.memory_space<vmem>>, vector<1x16xf32>
    %c107 = arith.constant 107 : index
    %c0_7 = arith.constant 0 : index
    %7 = vector.load %arg2[%c107, %c0_7] : memref<112x128xf32, #tpu.memory_space<vmem>>, vector<1x8xf32>
    %c0_8 = arith.constant 0 : index
    %c0_9 = arith.constant 0 : index
    %8 = vector.load %arg0[%c0_8, %c0_9] : memref<8x32xf32, #tpu.memory_space<vmem>>, vector<8x32xf32>
    %cst = arith.constant dense<0.000000e+00> : vector<8x64xf32>
    %9 = tpu.matmul %8, %0, %cst {dimension_numbers = #tpu.dot_dimension_numbers<[1], [0], [0], [1], [0, 0, 1, 1], [], []>} : vector<8x32xf32>, vector<32x64xf32>, vector<8x64xf32> -> vector<8x64xf32>
    %10 = vector.broadcast %4 : vector<1x64xf32> to vector<8x64xf32>
    %11 = arith.addf %9, %10 : vector<8x64xf32>
    %cst_10 = arith.constant 0.000000e+00 : f32
    %12 = vector.broadcast %cst_10 : f32 to vector<8x64xf32>
    %13 = arith.maximumf %11, %12 : vector<8x64xf32>
    %14 = vector.extract_strided_slice %13 {offsets = [0, 0], sizes = [8, 32], strides = [1, 1]} : vector<8x64xf32> to vector<8x32xf32>
    %15 = vector.extract_strided_slice %13 {offsets = [0, 32], sizes = [8, 32], strides = [1, 1]} : vector<8x64xf32> to vector<8x32xf32>
    %16 = tpu.concatenate %14, %15 in 0 : vector<8x32xf32>, vector<8x32xf32> -> vector<16x32xf32>
    %cst_11 = arith.constant dense<0.000000e+00> : vector<16x32xf32>
    %17 = tpu.matmul %16, %1, %cst_11 {dimension_numbers = #tpu.dot_dimension_numbers<[1], [0], [0], [1], [0, 0, 1, 1], [], []>} : vector<16x32xf32>, vector<32x32xf32>, vector<16x32xf32> -> vector<16x32xf32>
    %18 = vector.broadcast %5 : vector<1x32xf32> to vector<16x32xf32>
    %19 = arith.addf %17, %18 : vector<16x32xf32>
    %cst_12 = arith.constant 0.000000e+00 : f32
    %20 = vector.broadcast %cst_12 : f32 to vector<16x32xf32>
    %21 = arith.maximumf %19, %20 : vector<16x32xf32>
    %cst_13 = arith.constant dense<0.000000e+00> : vector<16x16xf32>
    %22 = tpu.matmul %21, %2, %cst_13 {dimension_numbers = #tpu.dot_dimension_numbers<[1], [0], [0], [1], [0, 0, 1, 1], [], []>} : vector<16x32xf32>, vector<32x16xf32>, vector<16x16xf32> -> vector<16x16xf32>
    %23 = vector.broadcast %6 : vector<1x16xf32> to vector<16x16xf32>
    %24 = arith.addf %22, %23 : vector<16x16xf32>
    %c0_14 = arith.constant 0 : index
    %c0_15 = arith.constant 0 : index
    %25 = vector.load %arg1[%c0_14, %c0_15] : memref<512x4xf32, #tpu.memory_space<vmem>>, vector<512x4xf32>
    %cst_16 = arith.constant dense<0.000000e+00> : vector<512x8xf32>
    %26 = tpu.matmul %25, %3, %cst_16 {dimension_numbers = #tpu.dot_dimension_numbers<[1], [0], [0], [1], [0, 0, 1, 1], [], []>} : vector<512x4xf32>, vector<4x8xf32>, vector<512x8xf32> -> vector<512x8xf32>
    %27 = vector.broadcast %7 : vector<1x8xf32> to vector<512x8xf32>
    %28 = arith.addf %26, %27 : vector<512x8xf32>
    %cst_17 = arith.constant 0.000000e+00 : f32
    %29 = vector.broadcast %cst_17 : f32 to vector<512x8xf32>
    %30 = arith.maximumf %28, %29 : vector<512x8xf32>
    %c0_18 = arith.constant 0 : index
    %c0_19 = arith.constant 0 : index
    %31 = vector.load %arg3[%c0_18, %c0_19] : memref<8x512xf32, #tpu.memory_space<vmem>>, vector<8x512xf32>
    %cst_20 = arith.constant dense<0.000000e+00> : vector<8x8xf32>
    %32 = tpu.matmul %31, %30, %cst_20 {dimension_numbers = #tpu.dot_dimension_numbers<[1], [0], [0], [1], [0, 0, 1, 1], [], []>} : vector<8x512xf32>, vector<512x8xf32>, vector<8x8xf32> -> vector<8x8xf32>
    %cst_21 = arith.constant 0.000000e+00 : f32
    %33 = vector.broadcast %cst_21 : f32 to vector<8x108xf32>
    %34 = vector.extract_strided_slice %24 {offsets = [0, 0], sizes = [8, 16], strides = [1, 1]} : vector<16x16xf32> to vector<8x16xf32>
    %35 = vector.extract_strided_slice %32 {offsets = [0, 0], sizes = [8, 4], strides = [1, 1]} : vector<8x8xf32> to vector<8x4xf32>
    %36 = tpu.concatenate %34, %35, %33 in 1 : vector<8x16xf32>, vector<8x4xf32>, vector<8x108xf32> -> vector<8x128xf32>
    %37 = vector.extract_strided_slice %24 {offsets = [8, 0], sizes = [8, 16], strides = [1, 1]} : vector<16x16xf32> to vector<8x16xf32>
    %38 = vector.extract_strided_slice %32 {offsets = [0, 4], sizes = [8, 4], strides = [1, 1]} : vector<8x8xf32> to vector<8x4xf32>
    %39 = tpu.concatenate %37, %38, %33 in 1 : vector<8x16xf32>, vector<8x4xf32>, vector<8x108xf32> -> vector<8x128xf32>
    %40 = tpu.concatenate %36, %39 in 0 : vector<8x128xf32>, vector<8x128xf32> -> vector<16x128xf32>
    %c0_22 = arith.constant 0 : index
    %c0_23 = arith.constant 0 : index
    %41 = vector.load %arg4[%c0_22, %c0_23] : memref<16x128xf32, #tpu.memory_space<vmem>>, vector<16x128xf32>
    tpu.vector_store %arg4[%c0_22, %c0_23], %40 {strides = array<i32>} : memref<16x128xf32, #tpu.memory_space<vmem>>, vector<16x128xf32>,
    return
  }
}

</mosaic_0001>

<llo_original>
// kernel: multi_scale_feature_embedding.1
$region0: #{multi_scale_feature_embedding.1}
  #allocation0 [shape = 'u32[]', space=smem, size = 0x4, offset = 0x4, fixed_abs, tag = 'smem constant byte address 0x4 - core index']
  #allocation1 [shape = 'u32[72,128]{1,0:T(1,128)}', space=vmem, size = 0x9000, scoped, tag = 'internal scratch']
  %s0 = inlined_call_operand.vmem [shape: f32[8,32], index: 0, kind: input, shape index: {}]
  %s1 = inlined_call_operand.vmem [shape: f32[512,4], index: 1, kind: input, shape index: {}]
  %s2 = inlined_call_operand.vmem [shape: f32[112,128], index: 2, kind: input, shape index: {}]
  %s3 = inlined_call_operand.vmem [shape: f32[8,512], index: 3, kind: input, shape index: {}]
  %s4 = inlined_call_operand.hbm [shape: f32[16,128], index: 4, kind: output, shape index: {}]
  %s5 = sld [smem:[#allocation0]]
  $region26: #{multi_scale_feature_embedding.1} parent=0
    _
  %s7 = ssub.s32 1, %s5
  %s8 = scalar_select 0, %s7, %s5
  $region1: #{multi_scale_feature_embedding.1} parent=0
    #allocation2 [shape = 'u8[8192]{0}', space=vmem, size = 0x2000, scoped, tag = 'output window, operand 0, single buffered']
    #allocation3 [shape = 's32[1]{0}', space=sflag, size = 0x4, scoped, tag = 'scoped memory for multi_scale_feature_embedding.1']
    %9 = vsyncpa [#allocation3], 0
    // Predicated region
    $region2: #{multi_scale_feature_embedding.1} parent=1 // pred_check
      _
    $region3: #{multi_scale_feature_embedding.1} parent=1 // pred_check_branch
      %11 = sbr.rel (0) target = $region5
    $region4: #{multi_scale_feature_embedding.1} parent=1 // pred_region
      _
    $region5: #{multi_scale_feature_embedding.1} parent=1 // pred_fallthru
      _
    // Predicated region
    $region6: #{multi_scale_feature_embedding.1} parent=1 // pred_check
      _
    $region7: #{multi_scale_feature_embedding.1} parent=1 // pred_check_branch
      %13 = sbr.rel (0) target = $region9
    $region8: #{multi_scale_feature_embedding.1} parent=1 // pred_region
      _
    $region9: #{multi_scale_feature_embedding.1} parent=1 // pred_fallthru
      _
    // Predicated region
    $region10: #{multi_scale_feature_embedding.1} parent=1 // pred_check
      _
    $region11: #{multi_scale_feature_embedding.1} parent=1 // pred_check_branch
      %15 = sbr.rel (0) target = $region13
    $region12: #{multi_scale_feature_embedding.1} parent=1 // pred_region
      _
    $region13: #{multi_scale_feature_embedding.1} parent=1 // pred_fallthru
      _
    // Predicated region
    $region14: #{multi_scale_feature_embedding.1} parent=1 // pred_check
      _
    $region15: #{multi_scale_feature_embedding.1} parent=1 // pred_check_branch
      %17 = sbr.rel (0) target = $region17
    $region16: #{multi_scale_feature_embedding.1} parent=1 // pred_region
      _
    $region17: #{multi_scale_feature_embedding.1} parent=1 // pred_fallthru
      _
    %v18 = vld [vmem:[%s2] sm:$0xff]
    %v19 = vld [vmem:[%s2 + $0x8] sm:$0xff]
    %v20 = vld [vmem:[%s2 + $0x10] sm:$0xff]
    %v21 = vld [vmem:[%s2 + $0x18] sm:$0xff]
    %v22 = vld [vmem:[%s2 + $0x20] sm:$0xff]
    %v23 = vld [vmem:[%s2 + $0x28] sm:$0xff]
    %v24 = vld [vmem:[%s2 + $0x30] sm:$0xff]
    %v25 = vld [vmem:[%s2 + $0x38] sm:$0xff]
    %v26 = vld [vmem:[%s2 + $0x40] sm:$0xff]
    %v27 = vld [vmem:[%s2 + $0x48] sm:$0xff]
    %v28 = vld [vmem:[%s2 + $0x50] sm:$0xff]
    %v29 = vld [vmem:[%s2 + $0x58] sm:$0xff]
    %v30 = vld [vmem:[%s2 + $0x60] sm:$0xf]
    %v31 = vld [vmem:[%s2 + $0x68] sm:$0x1]
    %v32 = vld [vmem:[%s2 + $0x69] sm:$0x1]
    %v33 = vld [vmem:[%s2 + $0x6a] sm:$0x1]
    %v34 = vld [vmem:[%s2 + $0x6b] sm:$0x1]
    %v35 = vld [vmem:[%s0] sm:$0xff]
    %v36 = vperm.slane %v31, 0
    %vm37 = vcmask 261120
    %v39 = vsel %vm37, %v35, 0
    %41 = vmatpush.msra.mxu0 0.0
    %42 = vmatpush.msra.mxu0 0.0
    %43 = vmatpush.msra.mxu0 0.0
    %44 = vmatpush.msra.mxu0 0.0
    %45 = vmatpush.msra.mxu0 0.0
    %46 = vmatpush.msra.mxu0 0.0
    %47 = vmatpush.msra.mxu0 0.0
    %48 = vmatpush.msra.mxu0 0.0
    %49 = vmatpush.msra.mxu0 0.0
    %50 = vmatpush.msra.mxu0 0.0
    %51 = vmatpush.msra.mxu0 0.0
    %52 = vmatpush.msra.mxu0 0.0
    %53 = vmatpush.msra.mxu0 %v21
    %54 = vmatpush.msra.mxu0 %v20
    %55 = vmatpush.msra.mxu0 %v19
    %56 = vmatpush.msra.mxu0 %v18
    %57 = vmatmul.f32.gmra.mxu0 %v39
    %v58 = vpop.f32.mrf.mxu0
    %v59 = vadd.f32 %v36, %v58
    %60 = vdwg.mxu0
    %v61 = vmax.f32 %v59, 0.0
    %63 = vrot.lane.b32.xlu0 %v61, 96
    %v64 = vpop.permute.xlu0 %63
    %v65 = vperm.slane %v32, 0
    %v66 = vsel %vm37, %v61, 0
    %v68 = vsel %vm37, %v64, 0
    %70 = vmatpush.msra.mxu0 0.0
    %71 = vmatpush.msra.mxu0 0.0
    %72 = vmatpush.msra.mxu0 0.0
    %73 = vmatpush.msra.mxu0 0.0
    %74 = vmatpush.msra.mxu0 0.0
    %75 = vmatpush.msra.mxu0 0.0
    %76 = vmatpush.msra.mxu0 0.0
    %77 = vmatpush.msra.mxu0 0.0
    %78 = vmatpush.msra.mxu0 0.0
    %79 = vmatpush.msra.mxu0 0.0
    %80 = vmatpush.msra.mxu0 0.0
    %81 = vmatpush.msra.mxu0 0.0
    %82 = vmatpush.msra.mxu0 %v25
    %83 = vmatpush.msra.mxu0 %v24
    %84 = vmatpush.msra.mxu0 %v23
    %85 = vmatpush.msra.mxu0 %v22
    %86 = vmatmul.f32.gmra.mxu0 %v66
    %v87 = vpop.f32.mrf.mxu0
    %v88 = vadd.f32 %v65, %v87
    %89 = vmatmul.f32.gmra.mxu0 %v68
    %v90 = vpop.f32.mrf.mxu0
    %v91 = vadd.f32 %v65, %v90
    %92 = vdwg.mxu0
    %v93 = vmax.f32 %v88, 0.0
    %v94 = vmax.f32 %v91, 0.0
    %v95 = vperm.slane %v33, 0
    %v97 = vsel %vm37, %v93, 0
    %v100 = vsel %vm37, %v94, 0
    %102 = vmatpush.msra.mxu0 0.0
    %103 = vmatpush.msra.mxu0 0.0
    %104 = vmatpush.msra.mxu0 0.0
    %105 = vmatpush.msra.mxu0 0.0
    %106 = vmatpush.msra.mxu0 0.0
    %107 = vmatpush.msra.mxu0 0.0
    %108 = vmatpush.msra.mxu0 0.0
    %109 = vmatpush.msra.mxu0 0.0
    %110 = vmatpush.msra.mxu0 0.0
    %111 = vmatpush.msra.mxu0 0.0
    %112 = vmatpush.msra.mxu0 0.0
    %113 = vmatpush.msra.mxu0 0.0
    %114 = vmatpush.msra.mxu0 %v29
    %115 = vmatpush.msra.mxu0 %v28
    %116 = vmatpush.msra.mxu0 %v27
    %117 = vmatpush.msra.mxu0 %v26
    %118 = vmatmul.f32.gmra.mxu0 %v97
    %v119 = vpop.f32.mrf.mxu0
    %v120 = vadd.f32 %v95, %v119
    %121 = vmatmul.f32.gmra.mxu0 %v100
    %v122 = vpop.f32.mrf.mxu0
    %v123 = vadd.f32 %v95, %v122
    %124 = vdwg.mxu0
    %v125 = vld [vmem:[%s1] sm:$0xff]
    %v126 = vld [vmem:[%s1 + $0x8] sm:$0xff]
    %v127 = vld [vmem:[%s1 + $0x10] sm:$0xff]
    %v128 = vld [vmem:[%s1 + $0x18] sm:$0xff]
    %v129 = vld [vmem:[%s1 + $0x20] sm:$0xff]
    %v130 = vld [vmem:[%s1 + $0x28] sm:$0xff]
    %v131 = vld [vmem:[%s1 + $0x30] sm:$0xff]
    %v132 = vld [vmem:[%s1 + $0x38] sm:$0xff]
    %v133 = vld [vmem:[%s1 + $0x40] sm:$0xff]
    %v134 = vld [vmem:[%s1 + $0x48] sm:$0xff]
    %v135 = vld [vmem:[%s1 + $0x50] sm:$0xff]
    %v136 = vld [vmem:[%s1 + $0x58] sm:$0xff]
    %v137 = vld [vmem:[%s1 + $0x60] sm:$0xff]
    %v138 = vld [vmem:[%s1 + $0x68] sm:$0xff]
    %v139 = vld [vmem:[%s1 + $0x70] sm:$0xff]
    %v140 = vld [vmem:[%s1 + $0x78] sm:$0xff]
    %v141 = vld [vmem:[%s1 + $0x80] sm:$0xff]
    %v142 = vld [vmem:[%s1 + $0x88] sm:$0xff]
    %v143 = vld [vmem:[%s1 + $0x90] sm:$0xff]
    %v144 = vld [vmem:[%s1 + $0x98] sm:$0xff]
    %v145 = vld [vmem:[%s1 + $0xa0] sm:$0xff]
    %v146 = vld [vmem:[%s1 + $0xa8] sm:$0xff]
    %v147 = vld [vmem:[%s1 + $0xb0] sm:$0xff]
    %v148 = vld [vmem:[%s1 + $0xb8] sm:$0xff]
    %v149 = vld [vmem:[%s1 + $0xc0] sm:$0xff]
    %v150 = vld [vmem:[%s1 + $0xc8] sm:$0xff]
    %v151 = vld [vmem:[%s1 + $0xd0] sm:$0xff]
    %v152 = vld [vmem:[%s1 + $0xd8] sm:$0xff]
    %v153 = vld [vmem:[%s1 + $0xe0] sm:$0xff]
    %v154 = vld [vmem:[%s1 + $0xe8] sm:$0xff]
    %v155 = vld [vmem:[%s1 + $0xf0] sm:$0xff]
    %v156 = vld [vmem:[%s1 + $0xf8] sm:$0xff]
    %v157 = vld [vmem:[%s1 + $0x100] sm:$0xff]
    %v158 = vld [vmem:[%s1 + $0x108] sm:$0xff]
    %v159 = vld [vmem:[%s1 + $0x110] sm:$0xff]
    %v160 = vld [vmem:[%s1 + $0x118] sm:$0xff]
    %v161 = vld [vmem:[%s1 + $0x120] sm:$0xff]
    %v162 = vld [vmem:[%s1 + $0x128] sm:$0xff]
    %v163 = vld [vmem:[%s1 + $0x130] sm:$0xff]
    %v164 = vld [vmem:[%s1 + $0x138] sm:$0xff]
    %v165 = vld [vmem:[%s1 + $0x140] sm:$0xff]
    %v166 = vld [vmem:[%s1 + $0x148] sm:$0xff]
    %v167 = vld [vmem:[%s1 + $0x150] sm:$0xff]
    %v168 = vld [vmem:[%s1 + $0x158] sm:$0xff]
    %v169 = vld [vmem:[%s1 + $0x160] sm:$0xff]
    %v170 = vld [vmem:[%s1 + $0x168] sm:$0xff]
    %v171 = vld [vmem:[%s1 + $0x170] sm:$0xff]
    %v172 = vld [vmem:[%s1 + $0x178] sm:$0xff]
    %v173 = vld [vmem:[%s1 + $0x180] sm:$0xff]
    %v174 = vld [vmem:[%s1 + $0x188] sm:$0xff]
    %v175 = vld [vmem:[%s1 + $0x190] sm:$0xff]
    %v176 = vld [vmem:[%s1 + $0x198] sm:$0xff]
    %v177 = vld [vmem:[%s1 + $0x1a0] sm:$0xff]
    %v178 = vld [vmem:[%s1 + $0x1a8] sm:$0xff]
    %v179 = vld [vmem:[%s1 + $0x1b0] sm:$0xff]
    %v180 = vld [vmem:[%s1 + $0x1b8] sm:$0xff]
    %v181 = vld [vmem:[%s1 + $0x1c0] sm:$0xff]
    %v182 = vld [vmem:[%s1 + $0x1c8] sm:$0xff]
    %v183 = vld [vmem:[%s1 + $0x1d0] sm:$0xff]
    %v184 = vld [vmem:[%s1 + $0x1d8] sm:$0xff]
    %v185 = vld [vmem:[%s1 + $0x1e0] sm:$0xff]
    %v186 = vld [vmem:[%s1 + $0x1e8] sm:$0xff]
    %v187 = vld [vmem:[%s1 + $0x1f0] sm:$0xff]
    %v188 = vld [vmem:[%s1 + $0x1f8] sm:$0xff]
    %v189 = vperm.slane %v34, 0
    %vm190 = vcmask 31744
    %v192 = vsel %vm190, %v125, 0
    %v195 = vsel %vm190, %v126, 0
    %v198 = vsel %vm190, %v127, 0
    %v201 = vsel %vm190, %v128, 0
    %v204 = vsel %vm190, %v129, 0
    %v207 = vsel %vm190, %v130, 0
    %v210 = vsel %vm190, %v131, 0
    %v213 = vsel %vm190, %v132, 0
    %v216 = vsel %vm190, %v133, 0
    %v219 = vsel %vm190, %v134, 0
    %v222 = vsel %vm190, %v135, 0
    %v225 = vsel %vm190, %v136, 0
    %v228 = vsel %vm190, %v137, 0
    %v231 = vsel %vm190, %v138, 0
    %v234 = vsel %vm190, %v139, 0
    %v237 = vsel %vm190, %v140, 0
    %v240 = vsel %vm190, %v141, 0
    %v243 = vsel %vm190, %v142, 0
    %v246 = vsel %vm190, %v143, 0
    %v249 = vsel %vm190, %v144, 0
    %v252 = vsel %vm190, %v145, 0
    %v255 = vsel %vm190, %v146, 0
    %v258 = vsel %vm190, %v147, 0
    %v261 = vsel %vm190, %v148, 0
    %v264 = vsel %vm190, %v149, 0
    %v267 = vsel %vm190, %v150, 0
    %v270 = vsel %vm190, %v151, 0
    %v273 = vsel %vm190, %v152, 0
    %v276 = vsel %vm190, %v153, 0
    %v279 = vsel %vm190, %v154, 0
    %v282 = vsel %vm190, %v155, 0
    %v285 = vsel %vm190, %v156, 0
    %v288 = vsel %vm190, %v157, 0
    %v291 = vsel %vm190, %v158, 0
    %v294 = vsel %vm190, %v159, 0
    %v297 = vsel %vm190, %v160, 0
    %v300 = vsel %vm190, %v161, 0
    %v303 = vsel %vm190, %v162, 0
    %v306 = vsel %vm190, %v163, 0
    %v309 = vsel %vm190, %v164, 0
    %v312 = vsel %vm190, %v165, 0
    %v315 = vsel %vm190, %v166, 0
    %v318 = vsel %vm190, %v167, 0
    %v321 = vsel %vm190, %v168, 0
    %v324 = vsel %vm190, %v169, 0
    %v327 = vsel %vm190, %v170, 0
    %v330 = vsel %vm190, %v171, 0
    %v333 = vsel %vm190, %v172, 0
    %v336 = vsel %vm190, %v173, 0
    %v339 = vsel %vm190, %v174, 0
    %v342 = vsel %vm190, %v175, 0
    %v345 = vsel %vm190, %v176, 0
    %v348 = vsel %vm190, %v177, 0
    %v351 = vsel %vm190, %v178, 0
    %v354 = vsel %vm190, %v179, 0
    %v357 = vsel %vm190, %v180, 0
    %v360 = vsel %vm190, %v181, 0
    %v363 = vsel %vm190, %v182, 0
    %v366 = vsel %vm190, %v183, 0
    %v369 = vsel %vm190, %v184, 0
    %v372 = vsel %vm190, %v185, 0
    %v375 = vsel %vm190, %v186, 0
    %v378 = vsel %vm190, %v187, 0
    %v381 = vsel %vm190, %v188, 0
    %vm383 = vcmask 1043456
    %v385 = vsel %vm383, %v30, 0
    %387 = vmatpush.msra.mxu0 0.0
    %388 = vmatpush.msra.mxu0 0.0
    %389 = vmatpush.msra.mxu0 0.0
    %390 = vmatpush.msra.mxu0 0.0
    %391 = vmatpush.msra.mxu0 0.0
    %392 = vmatpush.msra.mxu0 0.0
    %393 = vmatpush.msra.mxu0 0.0
    %394 = vmatpush.msra.mxu0 0.0
    %395 = vmatpush.msra.mxu0 0.0
    %396 = vmatpush.msra.mxu0 0.0
    %397 = vmatpush.msra.mxu0 0.0
    %398 = vmatpush.msra.mxu0 0.0
    %399 = vmatpush.msra.mxu0 0.0
    %400 = vmatpush.msra.mxu0 0.0
    %401 = vmatpush.msra.mxu0 0.0
    %402 = vmatpush.msra.mxu0 %v385
    %403 = vmatmul.f32.gmra.mxu0 %v192
    %v404 = vpop.f32.mrf.mxu0
    %v405 = vadd.f32 %v189, %v404
    %406 = vmatmul.f32.gmra.mxu0 %v195
    %v407 = vpop.f32.mrf.mxu0
    %v408 = vadd.f32 %v189, %v407
    %409 = vmatmul.f32.gmra.mxu0 %v198
    %v410 = vpop.f32.mrf.mxu0
    %v411 = vadd.f32 %v189, %v410
    %412 = vmatmul.f32.gmra.mxu0 %v201
    %v413 = vpop.f32.mrf.mxu0
    %v414 = vadd.f32 %v189, %v413
    %415 = vmatmul.f32.gmra.mxu0 %v204
    %v416 = vpop.f32.mrf.mxu0
    %v417 = vadd.f32 %v189, %v416
    %418 = vmatmul.f32.gmra.mxu0 %v207
    %v419 = vpop.f32.mrf.mxu0
    %v420 = vadd.f32 %v189, %v419
    %421 = vmatmul.f32.gmra.mxu0 %v210
    %v422 = vpop.f32.mrf.mxu0
    %v423 = vadd.f32 %v189, %v422
    %424 = vmatmul.f32.gmra.mxu0 %v213
    %v425 = vpop.f32.mrf.mxu0
    %v426 = vadd.f32 %v189, %v425
    %427 = vmatmul.f32.gmra.mxu0 %v216
    %v428 = vpop.f32.mrf.mxu0
    %v429 = vadd.f32 %v189, %v428
    %430 = vmatmul.f32.gmra.mxu0 %v219
    %v431 = vpop.f32.mrf.mxu0
    %v432 = vadd.f32 %v189, %v431
    %433 = vmatmul.f32.gmra.mxu0 %v222
    %v434 = vpop.f32.mrf.mxu0
    %v435 = vadd.f32 %v189, %v434
    %436 = vmatmul.f32.gmra.mxu0 %v225
    %v437 = vpop.f32.mrf.mxu0
    %v438 = vadd.f32 %v189, %v437
    %439 = vmatmul.f32.gmra.mxu0 %v228
    %v440 = vpop.f32.mrf.mxu0
    %v441 = vadd.f32 %v189, %v440
    %442 = vmatmul.f32.gmra.mxu0 %v231
    %v443 = vpop.f32.mrf.mxu0
    %v444 = vadd.f32 %v189, %v443
    %445 = vmatmul.f32.gmra.mxu0 %v234
    %v446 = vpop.f32.mrf.mxu0
    %v447 = vadd.f32 %v189, %v446
    %448 = vmatmul.f32.gmra.mxu0 %v237
    %v449 = vpop.f32.mrf.mxu0
    %v450 = vadd.f32 %v189, %v449
    %451 = vmatmul.f32.gmra.mxu0 %v240
    %v452 = vpop.f32.mrf.mxu0
    %v453 = vadd.f32 %v189, %v452
    %454 = vmatmul.f32.gmra.mxu0 %v243
    %v455 = vpop.f32.mrf.mxu0
    %v456 = vadd.f32 %v189, %v455
    %457 = vmatmul.f32.gmra.mxu0 %v246
    %v458 = vpop.f32.mrf.mxu0
    %v459 = vadd.f32 %v189, %v458
    %460 = vmatmul.f32.gmra.mxu0 %v249
    %v461 = vpop.f32.mrf.mxu0
    %v462 = vadd.f32 %v189, %v461
    %463 = vmatmul.f32.gmra.mxu0 %v252
    %v464 = vpop.f32.mrf.mxu0
    %v465 = vadd.f32 %v189, %v464
    %466 = vmatmul.f32.gmra.mxu0 %v255
    %v467 = vpop.f32.mrf.mxu0
    %v468 = vadd.f32 %v189, %v467
    %469 = vmatmul.f32.gmra.mxu0 %v258
    %v470 = vpop.f32.mrf.mxu0
    %v471 = vadd.f32 %v189, %v470
    %472 = vmatmul.f32.gmra.mxu0 %v261
    %v473 = vpop.f32.mrf.mxu0
    %v474 = vadd.f32 %v189, %v473
    %475 = vmatmul.f32.gmra.mxu0 %v264
    %v476 = vpop.f32.mrf.mxu0
    %v477 = vadd.f32 %v189, %v476
    %478 = vmatmul.f32.gmra.mxu0 %v267
    %v479 = vpop.f32.mrf.mxu0
    %v480 = vadd.f32 %v189, %v479
    %481 = vmatmul.f32.gmra.mxu0 %v270
    %v482 = vpop.f32.mrf.mxu0
    %v483 = vadd.f32 %v189, %v482
    %484 = vmatmul.f32.gmra.mxu0 %v273
    %v485 = vpop.f32.mrf.mxu0
    %v486 = vadd.f32 %v189, %v485
    %487 = vmatmul.f32.gmra.mxu0 %v276
    %v488 = vpop.f32.mrf.mxu0
    %v489 = vadd.f32 %v189, %v488
    %490 = vmatmul.f32.gmra.mxu0 %v279
    %v491 = vpop.f32.mrf.mxu0
    %v492 = vadd.f32 %v189, %v491
    %493 = vmatmul.f32.gmra.mxu0 %v282
    %v494 = vpop.f32.mrf.mxu0
    %v495 = vadd.f32 %v189, %v494
    %496 = vmatmul.f32.gmra.mxu0 %v285
    %v497 = vpop.f32.mrf.mxu0
    %v498 = vadd.f32 %v189, %v497
    %499 = vmatmul.f32.gmra.mxu0 %v288
    %v500 = vpop.f32.mrf.mxu0
    %v501 = vadd.f32 %v189, %v500
    %502 = vmatmul.f32.gmra.mxu0 %v291
    %v503 = vpop.f32.mrf.mxu0
    %v504 = vadd.f32 %v189, %v503
    %505 = vmatmul.f32.gmra.mxu0 %v294
    %v506 = vpop.f32.mrf.mxu0
    %v507 = vadd.f32 %v189, %v506
    %508 = vmatmul.f32.gmra.mxu0 %v297
    %v509 = vpop.f32.mrf.mxu0
    %v510 = vadd.f32 %v189, %v509
    %511 = vmatmul.f32.gmra.mxu0 %v300
    %v512 = vpop.f32.mrf.mxu0
    %v513 = vadd.f32 %v189, %v512
    %514 = vmatmul.f32.gmra.mxu0 %v303
    %v515 = vpop.f32.mrf.mxu0
    %v516 = vadd.f32 %v189, %v515
    %517 = vmatmul.f32.gmra.mxu0 %v306
    %v518 = vpop.f32.mrf.mxu0
    %v519 = vadd.f32 %v189, %v518
    %520 = vmatmul.f32.gmra.mxu0 %v309
    %v521 = vpop.f32.mrf.mxu0
    %v522 = vadd.f32 %v189, %v521
    %523 = vmatmul.f32.gmra.mxu0 %v312
    %v524 = vpop.f32.mrf.mxu0
    %v525 = vadd.f32 %v189, %v524
    %526 = vmatmul.f32.gmra.mxu0 %v315
    %v527 = vpop.f32.mrf.mxu0
    %v528 = vadd.f32 %v189, %v527
    %529 = vmatmul.f32.gmra.mxu0 %v318
    %v530 = vpop.f32.mrf.mxu0
    %v531 = vadd.f32 %v189, %v530
    %532 = vmatmul.f32.gmra.mxu0 %v321
    %v533 = vpop.f32.mrf.mxu0
    %v534 = vadd.f32 %v189, %v533
    %535 = vmatmul.f32.gmra.mxu0 %v324
    %v536 = vpop.f32.mrf.mxu0
    %v537 = vadd.f32 %v189, %v536
    %538 = vmatmul.f32.gmra.mxu0 %v327
    %v539 = vpop.f32.mrf.mxu0
    %v540 = vadd.f32 %v189, %v539
    %541 = vmatmul.f32.gmra.mxu0 %v330
    %v542 = vpop.f32.mrf.mxu0
    %v543 = vadd.f32 %v189, %v542
    %544 = vmatmul.f32.gmra.mxu0 %v333
    %v545 = vpop.f32.mrf.mxu0
    %v546 = vadd.f32 %v189, %v545
    %547 = vmatmul.f32.gmra.mxu0 %v336
    %v548 = vpop.f32.mrf.mxu0
    %v549 = vadd.f32 %v189, %v548
    %550 = vmatmul.f32.gmra.mxu0 %v339
    %v551 = vpop.f32.mrf.mxu0
    %v552 = vadd.f32 %v189, %v551
    %553 = vmatmul.f32.gmra.mxu0 %v342
    %v554 = vpop.f32.mrf.mxu0
    %v555 = vadd.f32 %v189, %v554
    %556 = vmatmul.f32.gmra.mxu0 %v345
    %v557 = vpop.f32.mrf.mxu0
    %v558 = vadd.f32 %v189, %v557
    %559 = vmatmul.f32.gmra.mxu0 %v348
    %v560 = vpop.f32.mrf.mxu0
    %v561 = vadd.f32 %v189, %v560
    %562 = vmatmul.f32.gmra.mxu0 %v351
    %v563 = vpop.f32.mrf.mxu0
    %v564 = vadd.f32 %v189, %v563
    %565 = vmatmul.f32.gmra.mxu0 %v354
    %v566 = vpop.f32.mrf.mxu0
    %v567 = vadd.f32 %v189, %v566
    %568 = vmatmul.f32.gmra.mxu0 %v357
    %v569 = vpop.f32.mrf.mxu0
    %v570 = vadd.f32 %v189, %v569
    %571 = vmatmul.f32.gmra.mxu0 %v360
    %v572 = vpop.f32.mrf.mxu0
    %v573 = vadd.f32 %v189, %v572
    %574 = vmatmul.f32.gmra.mxu0 %v363
    %v575 = vpop.f32.mrf.mxu0
    %v576 = vadd.f32 %v189, %v575
    %577 = vmatmul.f32.gmra.mxu0 %v366
    %v578 = vpop.f32.mrf.mxu0
    %v579 = vadd.f32 %v189, %v578
    %580 = vmatmul.f32.gmra.mxu0 %v369
    %v581 = vpop.f32.mrf.mxu0
    %v582 = vadd.f32 %v189, %v581
    %583 = vmatmul.f32.gmra.mxu0 %v372
    %v584 = vpop.f32.mrf.mxu0
    %v585 = vadd.f32 %v189, %v584
    %586 = vmatmul.f32.gmra.mxu0 %v375
    %v587 = vpop.f32.mrf.mxu0
    %v588 = vadd.f32 %v189, %v587
    %589 = vmatmul.f32.gmra.mxu0 %v378
    %v590 = vpop.f32.mrf.mxu0
    %v591 = vadd.f32 %v189, %v590
    %592 = vmatmul.f32.gmra.mxu0 %v381
    %v593 = vpop.f32.mrf.mxu0
    %v594 = vadd.f32 %v189, %v593
    %595 = vdwg.mxu0
    %v596 = vmax.f32 %v405, 0.0
    %v597 = vmax.f32 %v408, 0.0
    %v598 = vmax.f32 %v411, 0.0
    %v599 = vmax.f32 %v414, 0.0
    %v600 = vmax.f32 %v417, 0.0
    %v601 = vmax.f32 %v420, 0.0
    %v602 = vmax.f32 %v423, 0.0
    %v603 = vmax.f32 %v426, 0.0
    %v604 = vmax.f32 %v429, 0.0
    %v605 = vmax.f32 %v432, 0.0
    %v606 = vmax.f32 %v435, 0.0
    %v607 = vmax.f32 %v438, 0.0
    %v608 = vmax.f32 %v441, 0.0
    %v609 = vmax.f32 %v444, 0.0
    %v610 = vmax.f32 %v447, 0.0
    %v611 = vmax.f32 %v450, 0.0
    %v612 = vmax.f32 %v453, 0.0
    %v613 = vmax.f32 %v456, 0.0
    %v614 = vmax.f32 %v459, 0.0
    %v615 = vmax.f32 %v462, 0.0
    %v616 = vmax.f32 %v465, 0.0
    %v617 = vmax.f32 %v468, 0.0
    %v618 = vmax.f32 %v471, 0.0
    %v619 = vmax.f32 %v474, 0.0
    %v620 = vmax.f32 %v477, 0.0
    %v621 = vmax.f32 %v480, 0.0
    %v622 = vmax.f32 %v483, 0.0
    %v623 = vmax.f32 %v486, 0.0
    %v624 = vmax.f32 %v489, 0.0
    %v625 = vmax.f32 %v492, 0.0
    %v626 = vmax.f32 %v495, 0.0
    %v627 = vmax.f32 %v498, 0.0
    %v628 = vmax.f32 %v501, 0.0
    %v629 = vmax.f32 %v504, 0.0
    %v630 = vmax.f32 %v507, 0.0
    %v631 = vmax.f32 %v510, 0.0
    %v632 = vmax.f32 %v513, 0.0
    %v633 = vmax.f32 %v516, 0.0
    %v634 = vmax.f32 %v519, 0.0
    %v635 = vmax.f32 %v522, 0.0
    %v636 = vmax.f32 %v525, 0.0
    %v637 = vmax.f32 %v528, 0.0
    %v638 = vmax.f32 %v531, 0.0
    %v639 = vmax.f32 %v534, 0.0
    %v640 = vmax.f32 %v537, 0.0
    %v641 = vmax.f32 %v540, 0.0
    %v642 = vmax.f32 %v543, 0.0
    %v643 = vmax.f32 %v546, 0.0
    %v644 = vmax.f32 %v549, 0.0
    %v645 = vmax.f32 %v552, 0.0
    %v646 = vmax.f32 %v555, 0.0
    %v647 = vmax.f32 %v558, 0.0
    %v648 = vmax.f32 %v561, 0.0
    %v649 = vmax.f32 %v564, 0.0
    %v650 = vmax.f32 %v567, 0.0
    %v651 = vmax.f32 %v570, 0.0
    %v652 = vmax.f32 %v573, 0.0
    %v653 = vmax.f32 %v576, 0.0
    %v654 = vmax.f32 %v579, 0.0
    %v655 = vmax.f32 %v582, 0.0
    %v656 = vmax.f32 %v585, 0.0
    %v657 = vmax.f32 %v588, 0.0
    %v658 = vmax.f32 %v591, 0.0
    %v659 = vmax.f32 %v594, 0.0
    %v660 = vld [vmem:[%s3] sm:$0xff]
    %v661 = vld [vmem:[%s3 + $0x8] sm:$0xff]
    %v662 = vld [vmem:[%s3 + $0x10] sm:$0xff]
    %v663 = vld [vmem:[%s3 + $0x18] sm:$0xff]
    %664 = vmatpush.msra.mxu0 %v611
    %665 = vmatpush.msra.mxu0 %v610
    %666 = vmatpush.msra.mxu0 %v609
    %667 = vmatpush.msra.mxu0 %v608
    %668 = vmatpush.msra.mxu0 %v607
    %669 = vmatpush.msra.mxu0 %v606
    %670 = vmatpush.msra.mxu0 %v605
    %671 = vmatpush.msra.mxu0 %v604
    %672 = vmatpush.msra.mxu0 %v603
    %673 = vmatpush.msra.mxu0 %v602
    %674 = vmatpush.msra.mxu0 %v601
    %675 = vmatpush.msra.mxu0 %v600
    %676 = vmatpush.msra.mxu0 %v599
    %677 = vmatpush.msra.mxu0 %v598
    %678 = vmatpush.msra.mxu0 %v597
    %679 = vmatpush.msra.mxu0 %v596
    %680 = vmatmul.f32.gmra.mxu0 %v660
    %v681 = vpop.f32.mrf.mxu0
    %v682 = vadd.f32 0.0, %v681
    %683 = vdwg.mxu0
    %684 = vmatpush.msra.mxu0 %v627
    %685 = vmatpush.msra.mxu0 %v626
    %686 = vmatpush.msra.mxu0 %v625
    %687 = vmatpush.msra.mxu0 %v624
    %688 = vmatpush.msra.mxu0 %v623
    %689 = vmatpush.msra.mxu0 %v622
    %690 = vmatpush.msra.mxu0 %v621
    %691 = vmatpush.msra.mxu0 %v620
    %692 = vmatpush.msra.mxu0 %v619
    %693 = vmatpush.msra.mxu0 %v618
    %694 = vmatpush.msra.mxu0 %v617
    %695 = vmatpush.msra.mxu0 %v616
    %696 = vmatpush.msra.mxu0 %v615
    %697 = vmatpush.msra.mxu0 %v614
    %698 = vmatpush.msra.mxu0 %v613
    %699 = vmatpush.msra.mxu0 %v612
    %700 = vmatmul.f32.gmra.mxu0 %v661
    %v701 = vpop.f32.mrf.mxu0
    %v702 = vadd.f32 %v682, %v701
    %703 = vdwg.mxu0
    %704 = vmatpush.msra.mxu0 %v643
    %705 = vmatpush.msra.mxu0 %v642
    %706 = vmatpush.msra.mxu0 %v641
    %707 = vmatpush.msra.mxu0 %v640
    %708 = vmatpush.msra.mxu0 %v639
    %709 = vmatpush.msra.mxu0 %v638
    %710 = vmatpush.msra.mxu0 %v637
    %711 = vmatpush.msra.mxu0 %v636
    %712 = vmatpush.msra.mxu0 %v635
    %713 = vmatpush.msra.mxu0 %v634
    %714 = vmatpush.msra.mxu0 %v633
    %715 = vmatpush.msra.mxu0 %v632
    %716 = vmatpush.msra.mxu0 %v631
    %717 = vmatpush.msra.mxu0 %v630
    %718 = vmatpush.msra.mxu0 %v629
    %719 = vmatpush.msra.mxu0 %v628
    %720 = vmatmul.f32.gmra.mxu0 %v662
    %v721 = vpop.f32.mrf.mxu0
    %v722 = vadd.f32 %v702, %v721
    %723 = vdwg.mxu0
    %724 = vmatpush.msra.mxu0 %v659
    %725 = vmatpush.msra.mxu0 %v658
    %726 = vmatpush.msra.mxu0 %v657
    %727 = vmatpush.msra.mxu0 %v656
    %728 = vmatpush.msra.mxu0 %v655
    %729 = vmatpush.msra.mxu0 %v654
    %730 = vmatpush.msra.mxu0 %v653
    %731 = vmatpush.msra.mxu0 %v652
    %732 = vmatpush.msra.mxu0 %v651
    %733 = vmatpush.msra.mxu0 %v650
    %734 = vmatpush.msra.mxu0 %v649
    %735 = vmatpush.msra.mxu0 %v648
    %736 = vmatpush.msra.mxu0 %v647
    %737 = vmatpush.msra.mxu0 %v646
    %738 = vmatpush.msra.mxu0 %v645
    %739 = vmatpush.msra.mxu0 %v644
    %740 = vmatmul.f32.gmra.mxu0 %v663
    %v741 = vpop.f32.mrf.mxu0
    %v742 = vadd.f32 %v722, %v741
    %743 = vdwg.mxu0
    %745 = vrot.lane.b32.xlu0 %v742, 16
    %v746 = vpop.permute.xlu0 %745
    %vm748 = vcmask 130048
    %v749 = vsel %vm748, %v120, %v746
    %vm750 = vcmask 162816
    %v751 = vsel %vm750, %v749, 0.0
    %752 = vrot.lane.b32.xlu0 %v742, 12
    %v753 = vpop.permute.xlu0 %752
    %v755 = vsel %vm748, %v123, %v753
    %v756 = vsel %vm750, %v755, 0.0
    %757 = vst [vmem:[#allocation2] sm:$0xff] %v751
    %758 = vst [vmem:[#allocation2 + $0x8] sm:$0xff] %v756
    // Predicated region
    $region18: #{multi_scale_feature_embedding.1} parent=1 // pred_check
      _
    $region19: #{multi_scale_feature_embedding.1} parent=1 // pred_check_branch
      %760 = sbr.rel (0) target = $region21
    $region20: #{multi_scale_feature_embedding.1} parent=1 // pred_region
      %762 = vsyncadd [#allocation3], 0
      %s763 = sshll.u32 [#allocation2], 4
      %s764 = int_to_ptr.vmem [resolvable:$true] %s763
      %s765 = sshll.u32 %s4, 4
      %s766 = int_to_ptr.hbm [resolvable:$true] %s765
      %771 = dma.vmem_to_hbm [thread:$0]  %s764, 256, %s766, [#allocation3], 128, 128, 8
    $region21: #{multi_scale_feature_embedding.1} parent=1 // pred_fallthru
      _
    // Predicated region
    $region22: #{multi_scale_feature_embedding.1} parent=1 // pred_check
      _
    $region23: #{multi_scale_feature_embedding.1} parent=1 // pred_check_branch
      %773 = sbr.rel (0) target = $region25
    $region24: #{multi_scale_feature_embedding.1} parent=1 // pred_region
      %775 = dma.done [#allocation3], 256
    $region25: #{multi_scale_feature_embedding.1} parent=1 // pred_fallthru
      _
    %776 = vsyncpa [#allocation3], 1

</llo_original>
